<compile_context>
chip_gen: v7x
topology: tpu7x:2x2x1
jax: 0.10.0
libtpu: 0.0.40
codegen_flags: <defaults>
</compile_context>

<pallas_src>
import jax
import jax.numpy as jnp
from jax.experimental import pallas as pl
from jax.experimental.pallas import tpu as pltpu

B, L, D_ENC = 8, 16, 31        # batch, sequence length, encoder embed dim
USE_PLL = True
E = D_ENC + int(USE_PLL)       # BatchNorm1d / DenseBlock input dim (32)
H = 64                         # DenseBlock hidden/output dim (= getOutputDim())
BN_EPS = 1e-5                  # torch.nn.BatchNorm1d default eps

# ---- parameter-slab layout (all rows have last dim H) ----
#   rows [0, D_ENC)        : BN-folded w1 rows for the summed token reps
#   row  D_ENC (= 31)      : BN-folded w1 row for the pll feature  (K=32 matmul)
W2_OFF = 32                    # rows [32, 96) : w2 (H, H)
TAIL_OFF = W2_OFF + H          # 96 (8-sublane aligned)
#   row TAIL_OFF + 0       : folded bias b1
#   row TAIL_OFF + 1       : bias b2
#   row TAIL_OFF + 2       : final projection weight wf (as a row)
#   rows TAIL_OFF+3..+7    : zero padding (keeps the tail load an aligned 8-row tile)
SLAB_ROWS = TAIL_OFF + 8       # 104


def averager_dense_kernel(reps_ref, slab_ref, out_ref):
    # --- SimpleAverager: SUM token reps across length.  reps_ref is (B, L, 32)
    #     with total_pll pre-placed in column 31 of token 0 (rest of that column
    #     zero), so the sum IS concat([summed_reps, pll]). ---
    x = jnp.sum(reps_ref[...], axis=1)                             # (B, 32)

    # --- unpack the parameter slab (static, 8-aligned ref slices) ---
    w1 = slab_ref[0:E, :]                                          # (32, H)
    w2 = slab_ref[W2_OFF:W2_OFF + H, :]                            # (H, H)
    tail = slab_ref[TAIL_OFF:TAIL_OFF + 8, :]                      # (8, H) aligned load
    b1 = tail[0:1, :]                                              # (1, H)
    b2 = tail[1:2, :]                                              # (1, H)
    wf = tail[2:3, :]                                              # (1, H)

    # --- DenseBlock layer 1 (BatchNorm folded into w1/b1; pll folded into K=32) ---
    h1 = jnp.maximum(jnp.dot(x, w1, preferred_element_type=jnp.float32) + b1, 0.0)

    # --- DenseBlock layer 2 (dropout p=0.0 is a no-op) ---
    h2 = jnp.maximum(jnp.dot(h1, w2, preferred_element_type=jnp.float32) + b2, 0.0)

    # --- final Linear(H, 1, bias=False): N=1 projection via VPU mul + lane reduce ---
    out_ref[...] = jnp.sum(h2 * wf, axis=-1, keepdims=True)        # (B, 1)


def fold_params(p):
    """Fold eval-mode BatchNorm1d into the first Linear and pack every parameter
    into one contiguous (SLAB_ROWS, H) f32 slab (single DMA instead of nine)."""
    scale = p["gamma"] / jnp.sqrt(p["var"] + BN_EPS)               # (1, E)
    shift = p["beta"] - p["mean"] * scale                          # (1, E)
    w1f = p["w1"] * scale.T                                        # (E, H): row k scaled
    b1f = p["b1"] + shift @ p["w1"]                                # (1, H)

    slab = jnp.zeros((SLAB_ROWS, H), jnp.float32)
    slab = slab.at[0:E, :].set(w1f)                                # rep rows + pll row 31
    slab = slab.at[W2_OFF:W2_OFF + H, :].set(p["w2"])
    slab = slab.at[TAIL_OFF + 0, :].set(b1f[0])
    slab = slab.at[TAIL_OFF + 1, :].set(p["b2"][0])
    slab = slab.at[TAIL_OFF + 2, :].set(p["wf"][:, 0])
    return slab


def simple_averager_dense(reps, pll, slab):
    """Gridless call, whole arrays resident in VMEM (total live data << 1 MiB)."""
    # Pad D_ENC 31 -> 32 (lane-denser DMA rows) and stash total_pll in the padded
    # column of token 0 so the in-kernel length-sum reconstructs the concat.
    reps_aug = jnp.pad(reps, ((0, 0), (0, 0), (0, E - D_ENC)))
    reps_aug = reps_aug.at[:, 0, D_ENC].set(pll[:, 0])             # (B, L, 32)

    vmem = pl.BlockSpec(memory_space=pltpu.MemorySpace.VMEM)
    flops = 2 * B * (E * H + H * H) + 2 * B * H
    bytes_accessed = (reps_aug.size + slab.size + B) * 4           # ~43 KiB
    out = pl.pallas_call(
        averager_dense_kernel,
        out_shape=jax.ShapeDtypeStruct((B, 1), jnp.float32),
        in_specs=[vmem, vmem],
        out_specs=vmem,
        cost_estimate=pl.CostEstimate(flops=flops, transcendentals=0,
                                      bytes_accessed=bytes_accessed),
    )(reps_aug, slab)
    return jnp.squeeze(out, axis=1)   # torch .squeeze(dim=1) -> (B,)


def reference(reps, pll, p):
    """Pure-JAX reference of the same forward pass (unfolded parameters)."""
    summed = jnp.sum(reps, axis=1)
    embed = jnp.concatenate([summed, pll], axis=-1)
    bn = (embed - p["mean"]) / jnp.sqrt(p["var"] + BN_EPS) * p["gamma"] + p["beta"]
    h1 = jnp.maximum(bn @ p["w1"] + p["b1"], 0.0)
    h2 = jnp.maximum(h1 @ p["w2"] + p["b2"], 0.0)
    return (h2 @ p["wf"]).squeeze(1)


if __name__ == "__main__":
    key = jax.random.PRNGKey(0)
    ks = jax.random.split(key, 11)

    # Synthetic encoder outputs (stand-in for ESM token reps + total_pll).
    reps = jax.random.normal(ks[0], (B, L, D_ENC), dtype=jnp.float32)
    pll = jax.random.normal(ks[1], (B, 1), dtype=jnp.float32)

    # Deterministic parameters (BatchNorm1d eval-mode stats + affine, DenseBlock, final).
    params = dict(
        gamma=1.0 + 0.1 * jax.random.normal(ks[2], (1, E), dtype=jnp.float32),
        beta=0.1 * jax.random.normal(ks[3], (1, E), dtype=jnp.float32),
        mean=0.1 * jax.random.normal(ks[4], (1, E), dtype=jnp.float32),
        var=jax.nn.softplus(jax.random.normal(ks[5], (1, E), dtype=jnp.float32)) + 0.5,
        w1=jax.random.normal(ks[6], (E, H), dtype=jnp.float32) / jnp.sqrt(E).astype(jnp.float32),
        b1=0.01 * jax.random.normal(ks[7], (1, H), dtype=jnp.float32),
        w2=jax.random.normal(ks[8], (H, H), dtype=jnp.float32) / jnp.sqrt(H).astype(jnp.float32),
        b2=0.01 * jax.random.normal(ks[9], (1, H), dtype=jnp.float32),
        wf=jax.random.normal(ks[10], (H, 1), dtype=jnp.float32) / jnp.sqrt(H).astype(jnp.float32),
    )

    # Fold BN + pack parameters ONCE (parameters, not per-call data).
    slab = jax.block_until_ready(fold_params(params))

    out = simple_averager_dense(reps, pll, slab)
    out = jax.block_until_ready(out)

    ref = reference(reps, pll, params)
    assert out.shape == (B,), out.shape
    assert jnp.allclose(out, ref, atol=5e-4, rtol=5e-4), (out, ref)
    print("KERNEL_OK")
</pallas_src>

<mosaic_0001>
module attributes {stable_mosaic.version = 11 : i64} {
  func.func @averager_dense_kernel(%arg0: memref<8x16x32xf32, #tpu.memory_space<vmem>>, %arg1: memref<104x64xf32, #tpu.memory_space<vmem>>, %arg2: memref<8x1xf32, #tpu.memory_space<vmem>>) attributes {dimension_semantics = [], scalar_prefetch = 0 : i64, scratch_operands = 0 : i64, tpu.core_type = #tpu.core_type<tc>} {
    %c0 = arith.constant 0 : index
    %c0_0 = arith.constant 0 : index
    %c0_1 = arith.constant 0 : index
    %0 = vector.load %arg0[%c0, %c0_0, %c0_1] : memref<8x16x32xf32, #tpu.memory_space<vmem>>, vector<8x16x32xf32>
    %cst = arith.constant dense<0.000000e+00> : vector<8x32xf32>
    %1 = vector.multi_reduction <add>, %0, %cst [1] : vector<8x16x32xf32> to vector<8x32xf32>
    %c0_2 = arith.constant 0 : index
    %c0_3 = arith.constant 0 : index
    %2 = vector.load %arg1[%c0_2, %c0_3] : memref<104x64xf32, #tpu.memory_space<vmem>>, vector<32x64xf32>
    %c32 = arith.constant 32 : index
    %c0_4 = arith.constant 0 : index
    %3 = vector.load %arg1[%c32, %c0_4] : memref<104x64xf32, #tpu.memory_space<vmem>>, vector<64x64xf32>
    %c96 = arith.constant 96 : index
    %c0_5 = arith.constant 0 : index
    %4 = vector.load %arg1[%c96, %c0_5] : memref<104x64xf32, #tpu.memory_space<vmem>>, vector<8x64xf32>
    %5 = vector.extract_strided_slice %4 {offsets = [0, 0], sizes = [1, 64], strides = [1, 1]} : vector<8x64xf32> to vector<1x64xf32>
    %6 = vector.extract_strided_slice %4 {offsets = [1, 0], sizes = [1, 64], strides = [1, 1]} : vector<8x64xf32> to vector<1x64xf32>
    %7 = vector.extract_strided_slice %4 {offsets = [2, 0], sizes = [1, 64], strides = [1, 1]} : vector<8x64xf32> to vector<1x64xf32>
    %cst_6 = arith.constant dense<0.000000e+00> : vector<8x64xf32>
    %8 = tpu.matmul %1, %2, %cst_6 {dimension_numbers = #tpu.dot_dimension_numbers<[1], [0], [0], [1], [0, 0, 1, 1], [], []>} : vector<8x32xf32>, vector<32x64xf32>, vector<8x64xf32> -> vector<8x64xf32>
    %9 = vector.broadcast %5 : vector<1x64xf32> to vector<8x64xf32>
    %10 = arith.addf %8, %9 : vector<8x64xf32>
    %cst_7 = arith.constant 0.000000e+00 : f32
    %11 = vector.broadcast %cst_7 : f32 to vector<8x64xf32>
    %12 = arith.maximumf %10, %11 : vector<8x64xf32>
    %cst_8 = arith.constant dense<0.000000e+00> : vector<8x64xf32>
    %13 = tpu.matmul %12, %3, %cst_8 {dimension_numbers = #tpu.dot_dimension_numbers<[1], [0], [0], [1], [0, 0, 1, 1], [], []>} : vector<8x64xf32>, vector<64x64xf32>, vector<8x64xf32> -> vector<8x64xf32>
    %14 = vector.broadcast %6 : vector<1x64xf32> to vector<8x64xf32>
    %15 = arith.addf %13, %14 : vector<8x64xf32>
    %cst_9 = arith.constant 0.000000e+00 : f32
    %16 = vector.broadcast %cst_9 : f32 to vector<8x64xf32>
    %17 = arith.maximumf %15, %16 : vector<8x64xf32>
    %18 = vector.broadcast %7 : vector<1x64xf32> to vector<8x64xf32>
    %19 = arith.mulf %17, %18 : vector<8x64xf32>
    %cst_10 = arith.constant dense<0.000000e+00> : vector<8xf32>
    %20 = vector.multi_reduction <add>, %19, %cst_10 [1] : vector<8x64xf32> to vector<8xf32>
    %21 = vector.shape_cast %20 : vector<8xf32> to vector<8x1xf32>
    %c0_11 = arith.constant 0 : index
    %c0_12 = arith.constant 0 : index
    %22 = vector.load %arg2[%c0_11, %c0_12] : memref<8x1xf32, #tpu.memory_space<vmem>>, vector<8x1xf32>
    tpu.vector_store %arg2[%c0_11, %c0_12], %21 {strides = array<i32>} : memref<8x1xf32, #tpu.memory_space<vmem>>, vector<8x1xf32>,
    return
  }
}

</mosaic_0001>

<llo_original>
// kernel: tpu_custom_call.1
$region0: #{tpu_custom_call.1}
  #allocation0 [shape = 'u32[]', space=smem, size = 0x4, offset = 0x4, fixed_abs, tag = 'smem constant byte address 0x4 - core index']
  #allocation1 [shape = 'u32[144,128]{1,0:T(1,128)}', space=vmem, size = 0x12000, scoped, tag = 'internal scratch']
  %s0 = inlined_call_operand.vmem [shape: f32[8,16,32], index: 0, kind: input, shape index: {}]
  %s1 = inlined_call_operand.vmem [shape: f32[104,64], index: 1, kind: input, shape index: {}]
  %s2 = inlined_call_operand.vmem [shape: f32[8,1], index: 2, kind: output, shape index: {}]
  %s3 = sld [smem:[#allocation0]]
  $region18: #{tpu_custom_call.1} parent=0
    _
  %s5 = ssub.s32 1, %s3
  %s6 = scalar_select 0, %s5, %s3
  // Predicated region
  $region2: #{tpu_custom_call.1} parent=0 // pred_check
    _
  $region3: #{tpu_custom_call.1} parent=0 // pred_check_branch
    %8 = sbr.rel (0) target = $region5
  $region4: #{tpu_custom_call.1} parent=0 // pred_region
    _
  $region5: #{tpu_custom_call.1} parent=0 // pred_fallthru
    _
  // Predicated region
  $region6: #{tpu_custom_call.1} parent=0 // pred_check
    _
  $region7: #{tpu_custom_call.1} parent=0 // pred_check_branch
    %10 = sbr.rel (0) target = $region9
  $region8: #{tpu_custom_call.1} parent=0 // pred_region
    _
  $region9: #{tpu_custom_call.1} parent=0 // pred_fallthru
    _
  %v11 = vld [vmem:[%s0] sm:$0xff]
  %v12 = vld [vmem:[%s0 + $0x8] sm:$0xff]
  %v13 = vld [vmem:[%s0 + $0x10] sm:$0xff]
  %v14 = vld [vmem:[%s0 + $0x18] sm:$0xff]
  %v15 = vld [vmem:[%s0 + $0x20] sm:$0xff]
  %v16 = vld [vmem:[%s0 + $0x28] sm:$0xff]
  %v17 = vld [vmem:[%s0 + $0x30] sm:$0xff]
  %v18 = vld [vmem:[%s0 + $0x38] sm:$0xff]
  %v19 = vld [vmem:[%s0 + $0x40] sm:$0xff]
  %v20 = vld [vmem:[%s0 + $0x48] sm:$0xff]
  %v21 = vld [vmem:[%s0 + $0x50] sm:$0xff]
  %v22 = vld [vmem:[%s0 + $0x58] sm:$0xff]
  %v23 = vld [vmem:[%s0 + $0x60] sm:$0xff]
  %v24 = vld [vmem:[%s0 + $0x68] sm:$0xff]
  %v25 = vld [vmem:[%s0 + $0x70] sm:$0xff]
  %v26 = vld [vmem:[%s0 + $0x78] sm:$0xff]
  %vm27 = vcmask 261120
  %v28 = vsel %vm27, %v11, 0.0
  %v29 = vsel %vm27, %v12, 0.0
  %v30 = vadd.f32 %v28, %v29
  %v31 = vrot.slane %v30, 4
  %v32 = vadd.f32 %v30, %v31
  %v33 = vrot.slane %v32, 2
  %v34 = vadd.f32 %v32, %v33
  %v35 = vrot.slane %v34, 1
  %v36 = vadd.f32 %v34, %v35
  %v37 = vsel %vm27, %v13, 0.0
  %v38 = vsel %vm27, %v14, 0.0
  %v39 = vadd.f32 %v37, %v38
  %v40 = vrot.slane %v39, 4
  %v41 = vadd.f32 %v39, %v40
  %v42 = vrot.slane %v41, 2
  %v43 = vadd.f32 %v41, %v42
  %v44 = vrot.slane %v43, 1
  %v45 = vadd.f32 %v43, %v44
  %v46 = vsel %vm27, %v15, 0.0
  %v47 = vsel %vm27, %v16, 0.0
  %v48 = vadd.f32 %v46, %v47
  %v49 = vrot.slane %v48, 4
  %v50 = vadd.f32 %v48, %v49
  %v51 = vrot.slane %v50, 2
  %v52 = vadd.f32 %v50, %v51
  %v53 = vrot.slane %v52, 1
  %v54 = vadd.f32 %v52, %v53
  %v55 = vsel %vm27, %v17, 0.0
  %v56 = vsel %vm27, %v18, 0.0
  %v57 = vadd.f32 %v55, %v56
  %v58 = vrot.slane %v57, 4
  %v59 = vadd.f32 %v57, %v58
  %v60 = vrot.slane %v59, 2
  %v61 = vadd.f32 %v59, %v60
  %v62 = vrot.slane %v61, 1
  %v63 = vadd.f32 %v61, %v62
  %v64 = vsel %vm27, %v19, 0.0
  %v65 = vsel %vm27, %v20, 0.0
  %v66 = vadd.f32 %v64, %v65
  %v67 = vrot.slane %v66, 4
  %v68 = vadd.f32 %v66, %v67
  %v69 = vrot.slane %v68, 2
  %v70 = vadd.f32 %v68, %v69
  %v71 = vrot.slane %v70, 1
  %v72 = vadd.f32 %v70, %v71
  %v73 = vsel %vm27, %v21, 0.0
  %v74 = vsel %vm27, %v22, 0.0
  %v75 = vadd.f32 %v73, %v74
  %v76 = vrot.slane %v75, 4
  %v77 = vadd.f32 %v75, %v76
  %v78 = vrot.slane %v77, 2
  %v79 = vadd.f32 %v77, %v78
  %v80 = vrot.slane %v79, 1
  %v81 = vadd.f32 %v79, %v80
  %v82 = vsel %vm27, %v23, 0.0
  %v83 = vsel %vm27, %v24, 0.0
  %v84 = vadd.f32 %v82, %v83
  %v85 = vrot.slane %v84, 4
  %v86 = vadd.f32 %v84, %v85
  %v87 = vrot.slane %v86, 2
  %v88 = vadd.f32 %v86, %v87
  %v89 = vrot.slane %v88, 1
  %v90 = vadd.f32 %v88, %v89
  %v91 = vsel %vm27, %v25, 0.0
  %v92 = vsel %vm27, %v26, 0.0
  %v93 = vadd.f32 %v91, %v92
  %v94 = vrot.slane %v93, 4
  %v95 = vadd.f32 %v93, %v94
  %v96 = vrot.slane %v95, 2
  %v97 = vadd.f32 %v95, %v96
  %v98 = vrot.slane %v97, 1
  %v99 = vadd.f32 %v97, %v98
  %v100 = vld [vmem:[%s1] sm:$0xff]
  %v101 = vld [vmem:[%s1 + $0x8] sm:$0xff]
  %v102 = vld [vmem:[%s1 + $0x10] sm:$0xff]
  %v103 = vld [vmem:[%s1 + $0x18] sm:$0xff]
  %v104 = vld [vmem:[%s1 + $0x20] sm:$0xff]
  %v105 = vld [vmem:[%s1 + $0x28] sm:$0xff]
  %v106 = vld [vmem:[%s1 + $0x30] sm:$0xff]
  %v107 = vld [vmem:[%s1 + $0x38] sm:$0xff]
  %v108 = vld [vmem:[%s1 + $0x40] sm:$0xff]
  %v109 = vld [vmem:[%s1 + $0x48] sm:$0xff]
  %v110 = vld [vmem:[%s1 + $0x50] sm:$0xff]
  %v111 = vld [vmem:[%s1 + $0x58] sm:$0xff]
  %v112 = vld [vmem:[%s1 + $0x60] sm:$0xff]
  %v113 = vlaneseq
  %v114 = vshrl.u32 %v113, 7
  %v115 = vsub.s32 0, %v114
  %v116 = vrot.slane %v112, %v115
  %vm125 = vcmask 1041409
  %v126 = vsel %vm125, %v45, %v36
  %vm127 = vcmask 1042434
  %v128 = vsel %vm127, %v54, %v126
  %vm129 = vcmask 1043459
  %v130 = vsel %vm129, %v63, %v128
  %vm131 = vcmask 1044484
  %v132 = vsel %vm131, %v72, %v130
  %vm133 = vcmask 1045509
  %v134 = vsel %vm133, %v81, %v132
  %vm135 = vcmask 1046534
  %v136 = vsel %vm135, %v90, %v134
  %vm137 = vcmask 1047559
  %v138 = vsel %vm137, %v99, %v136
  %v139 = vsel %vm27, %v138, 0
  %141 = vmatprep.subr.mxu0 0.0
  %142 = vmatpush1.msra.mxu0 %v100
  %143 = vmatprep.subr.mxu0 0.0
  %144 = vmatpush1.msra.mxu0 %v101
  %145 = vmatprep.subr.mxu0 0.0
  %146 = vmatpush1.msra.mxu0 %v102
  %147 = vmatprep.subr.mxu0 0.0
  %148 = vmatpush1.msra.mxu0 %v103
  %149 = vmatprep.subr.mxu0 0.0
  %150 = vmatpush1.msra.mxu0 0.0
  %151 = vmatprep.subr.mxu0 0.0
  %152 = vmatpush1.msra.mxu0 0.0
  %153 = vmatprep.subr.mxu0 0.0
  %154 = vmatpush1.msra.mxu0 0.0
  %155 = vmatprep.subr.mxu0 0.0
  %156 = vmatpush1.msra.mxu0 0.0
  %157 = vmatprep.subr.mxu0 0.0
  %158 = vmatpush1.msra.mxu0 0.0
  %159 = vmatprep.subr.mxu0 0.0
  %160 = vmatpush1.msra.mxu0 0.0
  %161 = vmatprep.subr.mxu0 0.0
  %162 = vmatpush1.msra.mxu0 0.0
  %163 = vmatprep.subr.mxu0 0.0
  %164 = vmatpush1.msra.mxu0 0.0
  %165 = vmatprep.subr.mxu0 0.0
  %166 = vmatpush1.msra.mxu0 0.0
  %167 = vmatprep.subr.mxu0 0.0
  %168 = vmatpush1.msra.mxu0 0.0
  %169 = vmatprep.subr.mxu0 0.0
  %170 = vmatpush1.msra.mxu0 0.0
  %171 = vmatprep.subr.mxu0 0.0
  %172 = vmatpush1.msra.mxu0 0.0
  %173 = vmatprep.subr.mxu0 0.0
  %174 = vmatpush1.msra.mxu0 0.0
  %175 = vmatprep.subr.mxu0 0.0
  %176 = vmatpush1.msra.mxu0 0.0
  %177 = vmatprep.subr.mxu0 0.0
  %178 = vmatpush1.msra.mxu0 0.0
  %179 = vmatprep.subr.mxu0 0.0
  %180 = vmatpush1.msra.mxu0 0.0
  %181 = vmatprep.subr.mxu0 0.0
  %182 = vmatpush1.msra.mxu0 0.0
  %183 = vmatprep.subr.mxu0 0.0
  %184 = vmatpush1.msra.mxu0 0.0
  %185 = vmatprep.subr.mxu0 0.0
  %186 = vmatpush1.msra.mxu0 0.0
  %187 = vmatprep.subr.mxu0 0.0
  %188 = vmatpush1.msra.mxu0 0.0
  %189 = vmatprep.subr.mxu0 0.0
  %190 = vmatpush1.msra.mxu0 0.0
  %191 = vmatprep.subr.mxu0 0.0
  %192 = vmatpush1.msra.mxu0 0.0
  %193 = vmatprep.subr.mxu0 0.0
  %194 = vmatpush1.msra.mxu0 0.0
  %195 = vmatprep.subr.mxu0 0.0
  %196 = vmatpush1.msra.mxu0 0.0
  %197 = vmatprep.subr.mxu0 0.0
  %198 = vmatpush1.msra.mxu0 0.0
  %199 = vmatprep.subr.mxu0 0.0
  %200 = vmatpush1.msra.mxu0 0.0
  %201 = vmatprep.subr.mxu0 0.0
  %202 = vmatpush1.msra.mxu0 0.0
  %203 = vmatprep.subr.mxu0 0.0
  %204 = vmatpush1.msra.mxu0 0.0
  %205 = vmatprep.mubr.f32.mxu0 0.0
  %206 = vmatmul.mubr.f32.gmra.mrb[0].mxu0 %v139
  %v207 = vpop.f32.mrb[0].mxu0
  %v208 = vadd.f32 %v116, %v207
  %v209 = vpop.f32.mrb[0].mxu0
  %210 = vdwg.mxu0
  %v211 = vmax.f32 %v208, 0.0
  %v212 = vlaneseq
  %v213 = vshrl.u32 %v212, 7
  %v214 = vsub.s32 1, %v213
  %v215 = vrot.slane %v112, %v214
  %vm216 = vcmask 523264
  %v218 = vsel %vm216, %v211, 0
  %220 = vmatprep.subr.mxu0 0.0
  %221 = vmatpush1.msra.mxu0 %v104
  %222 = vmatprep.subr.mxu0 0.0
  %223 = vmatpush1.msra.mxu0 %v105
  %224 = vmatprep.subr.mxu0 0.0
  %225 = vmatpush1.msra.mxu0 %v106
  %226 = vmatprep.subr.mxu0 0.0
  %227 = vmatpush1.msra.mxu0 %v107
  %228 = vmatprep.subr.mxu0 0.0
  %229 = vmatpush1.msra.mxu0 %v108
  %230 = vmatprep.subr.mxu0 0.0
  %231 = vmatpush1.msra.mxu0 %v109
  %232 = vmatprep.subr.mxu0 0.0
  %233 = vmatpush1.msra.mxu0 %v110
  %234 = vmatprep.subr.mxu0 0.0
  %235 = vmatpush1.msra.mxu0 %v111
  %236 = vmatprep.subr.mxu0 0.0
  %237 = vmatpush1.msra.mxu0 0.0
  %238 = vmatprep.subr.mxu0 0.0
  %239 = vmatpush1.msra.mxu0 0.0
  %240 = vmatprep.subr.mxu0 0.0
  %241 = vmatpush1.msra.mxu0 0.0
  %242 = vmatprep.subr.mxu0 0.0
  %243 = vmatpush1.msra.mxu0 0.0
  %244 = vmatprep.subr.mxu0 0.0
  %245 = vmatpush1.msra.mxu0 0.0
  %246 = vmatprep.subr.mxu0 0.0
  %247 = vmatpush1.msra.mxu0 0.0
  %248 = vmatprep.subr.mxu0 0.0
  %249 = vmatpush1.msra.mxu0 0.0
  %250 = vmatprep.subr.mxu0 0.0
  %251 = vmatpush1.msra.mxu0 0.0
  %252 = vmatprep.subr.mxu0 0.0
  %253 = vmatpush1.msra.mxu0 0.0
  %254 = vmatprep.subr.mxu0 0.0
  %255 = vmatpush1.msra.mxu0 0.0
  %256 = vmatprep.subr.mxu0 0.0
  %257 = vmatpush1.msra.mxu0 0.0
  %258 = vmatprep.subr.mxu0 0.0
  %259 = vmatpush1.msra.mxu0 0.0
  %260 = vmatprep.subr.mxu0 0.0
  %261 = vmatpush1.msra.mxu0 0.0
  %262 = vmatprep.subr.mxu0 0.0
  %263 = vmatpush1.msra.mxu0 0.0
  %264 = vmatprep.subr.mxu0 0.0
  %265 = vmatpush1.msra.mxu0 0.0
  %266 = vmatprep.subr.mxu0 0.0
  %267 = vmatpush1.msra.mxu0 0.0
  %268 = vmatprep.subr.mxu0 0.0
  %269 = vmatpush1.msra.mxu0 0.0
  %270 = vmatprep.subr.mxu0 0.0
  %271 = vmatpush1.msra.mxu0 0.0
  %272 = vmatprep.subr.mxu0 0.0
  %273 = vmatpush1.msra.mxu0 0.0
  %274 = vmatprep.subr.mxu0 0.0
  %275 = vmatpush1.msra.mxu0 0.0
  %276 = vmatprep.subr.mxu0 0.0
  %277 = vmatpush1.msra.mxu0 0.0
  %278 = vmatprep.subr.mxu0 0.0
  %279 = vmatpush1.msra.mxu0 0.0
  %280 = vmatprep.subr.mxu0 0.0
  %281 = vmatpush1.msra.mxu0 0.0
  %282 = vmatprep.subr.mxu0 0.0
  %283 = vmatpush1.msra.mxu0 0.0
  %284 = vmatprep.mubr.f32.mxu0 0.0
  %285 = vmatmul.mubr.f32.gmra.mrb[0].mxu0 %v218
  %v286 = vpop.f32.mrb[0].mxu0
  %v287 = vadd.f32 %v215, %v286
  %v288 = vpop.f32.mrb[0].mxu0
  %289 = vdwg.mxu0
  %v290 = vmax.f32 %v287, 0.0
  %v291 = vlaneseq
  %v292 = vshrl.u32 %v291, 7
  %v293 = vsub.s32 2, %v292
  %v294 = vrot.slane %v112, %v293
  %v295 = vmul.f32 %v290, %v294
  %v296 = vsel %vm216, %v295, 0.0
  %297 = vadd.xlane.f32.xlu0 %v296
  %v298 = vpop.xlane.xlu0 %297
  %vm299 = vcmask 7168
  %300 = vst.msk [vmem:[%s2] sm:$0xff] %vm299, %v298
  // Predicated region
  $region10: #{tpu_custom_call.1} parent=0 // pred_check
    _
  $region11: #{tpu_custom_call.1} parent=0 // pred_check_branch
    %302 = sbr.rel (0) target = $region13
  $region12: #{tpu_custom_call.1} parent=0 // pred_region
    _
  $region13: #{tpu_custom_call.1} parent=0 // pred_fallthru
    _
  // Predicated region
  $region14: #{tpu_custom_call.1} parent=0 // pred_check
    _
  $region15: #{tpu_custom_call.1} parent=0 // pred_check_branch
    %304 = sbr.rel (0) target = $region17
  $region16: #{tpu_custom_call.1} parent=0 // pred_region
    _
  $region17: #{tpu_custom_call.1} parent=0 // pred_fallthru
    _

</llo_original>
